<compile_context>
chip_gen: v5e
topology: v5e:2x2
jax: 0.10.0
libtpu: 0.0.40
codegen_flags: <defaults>
</compile_context>

<pallas_src>
import jax
import jax.numpy as jnp
from jax.experimental import pallas as pl
from jax.experimental.pallas import tpu as pltpu

FEATURE_SIZE = 20
HIDDEN = 64          # == BATCH_SIZE constant in the PyTorch file (layer width)
BN_EPS = 1e-5


def _bn_train(h, gamma, beta):
    # BatchNorm1d forward with batch statistics over the batch (sublane) axis.
    # One-pass variance (E[h^2] - mean^2): single read of h, half the VPU/XLU work
    # of the two-pass form.  rsqrt lowers to the EUP (free slot next to the matmuls).
    inv_n = jnp.float32(1.0 / h.shape[0])
    mean = jnp.sum(h, axis=0, keepdims=True) * inv_n
    ex2 = jnp.sum(h * h, axis=0, keepdims=True) * inv_n
    var = jnp.maximum(ex2 - mean * mean, 0.0)          # guard tiny negative fp drift
    return (h - mean) * jax.lax.rsqrt(var + BN_EPS) * gamma + beta


def binary_classification_kernel(
    x_ref,
    w1_ref, b1_ref, g1_ref, be1_ref,
    w2_ref, b2_ref, g2_ref, be2_ref,
    wo_ref, bo_ref,
    out_ref,
):
    # layer_1 + ReLU : bf16 operands on the MXU, f32 accumulation.
    x = x_ref[...].astype(jnp.bfloat16)                             # (B, 20)
    h = jnp.dot(x, w1_ref[...], preferred_element_type=jnp.float32) + b1_ref[...]
    h = jnp.maximum(h, 0.0)
    # batchnorm1 (f32)
    h = _bn_train(h, g1_ref[...], be1_ref[...])

    # layer_2 + ReLU : bf16 operands, f32 accumulation.
    h = jnp.dot(h.astype(jnp.bfloat16), w2_ref[...],
                preferred_element_type=jnp.float32) + b2_ref[...]
    h = jnp.maximum(h, 0.0)
    # batchnorm2 (f32)
    h = _bn_train(h, g2_ref[...], be2_ref[...])

    # dropout: identity (see TODO at top)

    # layer_out: N=1 output -> VPU multiply + XLU lane reduce instead of a degenerate
    # MXU matmul (avoids a full MXU pass + result-FIFO drain for a single column).
    out = jnp.sum(h * wo_ref[...], axis=-1, keepdims=True) + bo_ref[0, 0]
    out_ref[...] = out.astype(out_ref.dtype)


def binary_classification_forward(x, params):
    """x: (B, FEATURE_SIZE) float32.  Returns (B, 1) float32 logits."""
    B = x.shape[0]
    vmem = pl.BlockSpec(memory_space=pltpu.MemorySpace.VMEM)
    smem = pl.BlockSpec(memory_space=pltpu.MemorySpace.SMEM)

    args = (
        x,
        params["w1"].astype(jnp.bfloat16),       # (20, 64) bf16 for the MXU
        params["b1"], params["g1"], params["be1"],
        params["w2"].astype(jnp.bfloat16),       # (64, 64) bf16 for the MXU
        params["b2"], params["g2"], params["be2"],
        params["wo"].reshape(1, HIDDEN),         # (1, 64) lane row for the VPU reduce
        params["bo"],                            # (1, 1) scalar -> SMEM
    )
    in_specs = [vmem] * (len(args) - 1) + [smem]

    return pl.pallas_call(
        binary_classification_kernel,
        out_shape=jax.ShapeDtypeStruct((B, 1), jnp.float32),
        in_specs=in_specs,
        out_specs=vmem,
        # Single block keeps exact full-batch BatchNorm statistics.  For B in the tens of
        # thousands, add pltpu.CompilerParams(vmem_limit_bytes=...) or tile the batch with a
        # two-pass BN-stats scheme.
    )(*args)


def init_params(key):
    ks = jax.random.split(key, 6)
    scale1 = 1.0 / jnp.sqrt(FEATURE_SIZE)
    scale2 = 1.0 / jnp.sqrt(HIDDEN)
    return {
        # Linear weights stored as (in, out); biases as (1, out) for lane layout.
        "w1": jax.random.uniform(ks[0], (FEATURE_SIZE, HIDDEN), jnp.float32, -scale1, scale1),
        "b1": jax.random.uniform(ks[1], (1, HIDDEN), jnp.float32, -scale1, scale1),
        "w2": jax.random.uniform(ks[2], (HIDDEN, HIDDEN), jnp.float32, -scale2, scale2),
        "b2": jax.random.uniform(ks[3], (1, HIDDEN), jnp.float32, -scale2, scale2),
        "wo": jax.random.uniform(ks[4], (HIDDEN, 1), jnp.float32, -scale2, scale2),
        "bo": jax.random.uniform(ks[5], (1, 1), jnp.float32, -scale2, scale2),
        # BatchNorm affine params (deterministic, non-trivial).
        "g1": 1.0 + 0.01 * jnp.arange(HIDDEN, dtype=jnp.float32).reshape(1, HIDDEN),
        "be1": 0.02 * jnp.arange(HIDDEN, dtype=jnp.float32).reshape(1, HIDDEN),
        "g2": 1.0 - 0.005 * jnp.arange(HIDDEN, dtype=jnp.float32).reshape(1, HIDDEN),
        "be2": -0.01 * jnp.arange(HIDDEN, dtype=jnp.float32).reshape(1, HIDDEN),
    }


def reference_forward(x, p):
    # Pure f32 reference (train-mode BN with biased batch variance, dropout = identity).
    h = jnp.maximum(x @ p["w1"] + p["b1"], 0.0)
    m = h.mean(0, keepdims=True)
    v = ((h - m) ** 2).mean(0, keepdims=True)
    h = (h - m) / jnp.sqrt(v + BN_EPS) * p["g1"] + p["be1"]
    h = jnp.maximum(h @ p["w2"] + p["b2"], 0.0)
    m = h.mean(0, keepdims=True)
    v = ((h - m) ** 2).mean(0, keepdims=True)
    h = (h - m) / jnp.sqrt(v + BN_EPS) * p["g2"] + p["be2"]
    return h @ p["wo"] + p["bo"]


if __name__ == "__main__":
    key = jax.random.PRNGKey(0)
    k_x, k_p = jax.random.split(key)
    B = 64  # matches the module's natural batch size
    x = jax.random.normal(k_x, (B, FEATURE_SIZE), jnp.float32)
    params = init_params(k_p)

    out = binary_classification_forward(x, params)
    out = jax.block_until_ready(out)

    ref = reference_forward(x, params)
    assert out.shape == (B, 1), out.shape
    # bf16 MXU operands (f32 accumulate) -> ~1e-3 relative error per layer; use a loose tolerance.
    assert jnp.allclose(out, ref, atol=5e-2, rtol=5e-2), (out, ref)
    print("KERNEL_OK")
</pallas_src>

<mosaic_0001>
module attributes {stable_mosaic.version = 11 : i64} {
  func.func @binary_classification_kernel(%arg0: memref<64x20xf32, #tpu.memory_space<vmem>>, %arg1: memref<20x64xbf16, #tpu.memory_space<vmem>>, %arg2: memref<1x64xf32, #tpu.memory_space<vmem>>, %arg3: memref<1x64xf32, #tpu.memory_space<vmem>>, %arg4: memref<1x64xf32, #tpu.memory_space<vmem>>, %arg5: memref<64x64xbf16, #tpu.memory_space<vmem>>, %arg6: memref<1x64xf32, #tpu.memory_space<vmem>>, %arg7: memref<1x64xf32, #tpu.memory_space<vmem>>, %arg8: memref<1x64xf32, #tpu.memory_space<vmem>>, %arg9: memref<1x64xf32, #tpu.memory_space<vmem>>, %arg10: memref<1x1xf32, #tpu.memory_space<smem>>, %arg11: memref<64x1xf32, #tpu.memory_space<vmem>>) attributes {dimension_semantics = [], scalar_prefetch = 0 : i64, scratch_operands = 0 : i64, tpu.core_type = #tpu.core_type<tc>} {
    %c0 = arith.constant 0 : index
    %c0_0 = arith.constant 0 : index
    %0 = vector.load %arg0[%c0, %c0_0] : memref<64x20xf32, #tpu.memory_space<vmem>>, vector<64x20xf32>
    %1 = arith.truncf %0 : vector<64x20xf32> to vector<64x20xbf16>
    %c0_1 = arith.constant 0 : index
    %c0_2 = arith.constant 0 : index
    %2 = vector.load %arg1[%c0_1, %c0_2] : memref<20x64xbf16, #tpu.memory_space<vmem>>, vector<20x64xbf16>
    %cst = arith.constant dense<0.000000e+00> : vector<64x64xf32>
    %3 = tpu.matmul %1, %2, %cst {dimension_numbers = #tpu.dot_dimension_numbers<[1], [0], [0], [1], [0, 0, 1, 1], [], []>} : vector<64x20xbf16>, vector<20x64xbf16>, vector<64x64xf32> -> vector<64x64xf32>
    %c0_3 = arith.constant 0 : index
    %c0_4 = arith.constant 0 : index
    %4 = vector.load %arg2[%c0_3, %c0_4] : memref<1x64xf32, #tpu.memory_space<vmem>>, vector<1x64xf32>
    %5 = vector.broadcast %4 : vector<1x64xf32> to vector<64x64xf32>
    %6 = arith.addf %3, %5 : vector<64x64xf32>
    %cst_5 = arith.constant 0.000000e+00 : f32
    %7 = vector.broadcast %cst_5 : f32 to vector<64x64xf32>
    %8 = arith.maximumf %6, %7 : vector<64x64xf32>
    %c0_6 = arith.constant 0 : index
    %c0_7 = arith.constant 0 : index
    %9 = vector.load %arg3[%c0_6, %c0_7] : memref<1x64xf32, #tpu.memory_space<vmem>>, vector<1x64xf32>
    %c0_8 = arith.constant 0 : index
    %c0_9 = arith.constant 0 : index
    %10 = vector.load %arg4[%c0_8, %c0_9] : memref<1x64xf32, #tpu.memory_space<vmem>>, vector<1x64xf32>
    %cst_10 = arith.constant dense<0.000000e+00> : vector<64xf32>
    %11 = vector.multi_reduction <add>, %8, %cst_10 [0] : vector<64x64xf32> to vector<64xf32>
    %12 = vector.shape_cast %11 : vector<64xf32> to vector<1x64xf32>
    %cst_11 = arith.constant 1.562500e-02 : f32
    %13 = vector.broadcast %cst_11 : f32 to vector<1x64xf32>
    %14 = arith.mulf %12, %13 : vector<1x64xf32>
    %15 = arith.mulf %8, %8 : vector<64x64xf32>
    %cst_12 = arith.constant dense<0.000000e+00> : vector<64xf32>
    %16 = vector.multi_reduction <add>, %15, %cst_12 [0] : vector<64x64xf32> to vector<64xf32>
    %17 = vector.shape_cast %16 : vector<64xf32> to vector<1x64xf32>
    %cst_13 = arith.constant 1.562500e-02 : f32
    %18 = vector.broadcast %cst_13 : f32 to vector<1x64xf32>
    %19 = arith.mulf %17, %18 : vector<1x64xf32>
    %20 = arith.mulf %14, %14 : vector<1x64xf32>
    %21 = arith.subf %19, %20 : vector<1x64xf32>
    %cst_14 = arith.constant 0.000000e+00 : f32
    %22 = vector.broadcast %cst_14 : f32 to vector<1x64xf32>
    %23 = arith.maximumf %21, %22 : vector<1x64xf32>
    %24 = vector.broadcast %14 : vector<1x64xf32> to vector<64x64xf32>
    %25 = arith.subf %8, %24 : vector<64x64xf32>
    %cst_15 = arith.constant 9.99999974E-6 : f32
    %26 = vector.broadcast %cst_15 : f32 to vector<1x64xf32>
    %27 = arith.addf %23, %26 : vector<1x64xf32>
    %28 = math.rsqrt %27 : vector<1x64xf32>
    %29 = vector.broadcast %28 : vector<1x64xf32> to vector<64x64xf32>
    %30 = arith.mulf %25, %29 : vector<64x64xf32>
    %31 = vector.broadcast %9 : vector<1x64xf32> to vector<64x64xf32>
    %32 = arith.mulf %30, %31 : vector<64x64xf32>
    %33 = vector.broadcast %10 : vector<1x64xf32> to vector<64x64xf32>
    %34 = arith.addf %32, %33 : vector<64x64xf32>
    %35 = arith.truncf %34 : vector<64x64xf32> to vector<64x64xbf16>
    %c0_16 = arith.constant 0 : index
    %c0_17 = arith.constant 0 : index
    %36 = vector.load %arg5[%c0_16, %c0_17] : memref<64x64xbf16, #tpu.memory_space<vmem>>, vector<64x64xbf16>
    %cst_18 = arith.constant dense<0.000000e+00> : vector<64x64xf32>
    %37 = tpu.matmul %35, %36, %cst_18 {dimension_numbers = #tpu.dot_dimension_numbers<[1], [0], [0], [1], [0, 0, 1, 1], [], []>} : vector<64x64xbf16>, vector<64x64xbf16>, vector<64x64xf32> -> vector<64x64xf32>
    %c0_19 = arith.constant 0 : index
    %c0_20 = arith.constant 0 : index
    %38 = vector.load %arg6[%c0_19, %c0_20] : memref<1x64xf32, #tpu.memory_space<vmem>>, vector<1x64xf32>
    %39 = vector.broadcast %38 : vector<1x64xf32> to vector<64x64xf32>
    %40 = arith.addf %37, %39 : vector<64x64xf32>
    %cst_21 = arith.constant 0.000000e+00 : f32
    %41 = vector.broadcast %cst_21 : f32 to vector<64x64xf32>
    %42 = arith.maximumf %40, %41 : vector<64x64xf32>
    %c0_22 = arith.constant 0 : index
    %c0_23 = arith.constant 0 : index
    %43 = vector.load %arg7[%c0_22, %c0_23] : memref<1x64xf32, #tpu.memory_space<vmem>>, vector<1x64xf32>
    %c0_24 = arith.constant 0 : index
    %c0_25 = arith.constant 0 : index
    %44 = vector.load %arg8[%c0_24, %c0_25] : memref<1x64xf32, #tpu.memory_space<vmem>>, vector<1x64xf32>
    %cst_26 = arith.constant dense<0.000000e+00> : vector<64xf32>
    %45 = vector.multi_reduction <add>, %42, %cst_26 [0] : vector<64x64xf32> to vector<64xf32>
    %46 = vector.shape_cast %45 : vector<64xf32> to vector<1x64xf32>
    %cst_27 = arith.constant 1.562500e-02 : f32
    %47 = vector.broadcast %cst_27 : f32 to vector<1x64xf32>
    %48 = arith.mulf %46, %47 : vector<1x64xf32>
    %49 = arith.mulf %42, %42 : vector<64x64xf32>
    %cst_28 = arith.constant dense<0.000000e+00> : vector<64xf32>
    %50 = vector.multi_reduction <add>, %49, %cst_28 [0] : vector<64x64xf32> to vector<64xf32>
    %51 = vector.shape_cast %50 : vector<64xf32> to vector<1x64xf32>
    %cst_29 = arith.constant 1.562500e-02 : f32
    %52 = vector.broadcast %cst_29 : f32 to vector<1x64xf32>
    %53 = arith.mulf %51, %52 : vector<1x64xf32>
    %54 = arith.mulf %48, %48 : vector<1x64xf32>
    %55 = arith.subf %53, %54 : vector<1x64xf32>
    %cst_30 = arith.constant 0.000000e+00 : f32
    %56 = vector.broadcast %cst_30 : f32 to vector<1x64xf32>
    %57 = arith.maximumf %55, %56 : vector<1x64xf32>
    %58 = vector.broadcast %48 : vector<1x64xf32> to vector<64x64xf32>
    %59 = arith.subf %42, %58 : vector<64x64xf32>
    %cst_31 = arith.constant 9.99999974E-6 : f32
    %60 = vector.broadcast %cst_31 : f32 to vector<1x64xf32>
    %61 = arith.addf %57, %60 : vector<1x64xf32>
    %62 = math.rsqrt %61 : vector<1x64xf32>
    %63 = vector.broadcast %62 : vector<1x64xf32> to vector<64x64xf32>
    %64 = arith.mulf %59, %63 : vector<64x64xf32>
    %65 = vector.broadcast %43 : vector<1x64xf32> to vector<64x64xf32>
    %66 = arith.mulf %64, %65 : vector<64x64xf32>
    %67 = vector.broadcast %44 : vector<1x64xf32> to vector<64x64xf32>
    %68 = arith.addf %66, %67 : vector<64x64xf32>
    %c0_32 = arith.constant 0 : index
    %c0_33 = arith.constant 0 : index
    %69 = vector.load %arg9[%c0_32, %c0_33] : memref<1x64xf32, #tpu.memory_space<vmem>>, vector<1x64xf32>
    %70 = vector.broadcast %69 : vector<1x64xf32> to vector<64x64xf32>
    %71 = arith.mulf %68, %70 : vector<64x64xf32>
    %cst_34 = arith.constant dense<0.000000e+00> : vector<64xf32>
    %72 = vector.multi_reduction <add>, %71, %cst_34 [1] : vector<64x64xf32> to vector<64xf32>
    %73 = vector.shape_cast %72 : vector<64xf32> to vector<64x1xf32>
    %c0_35 = arith.constant 0 : index
    %c0_36 = arith.constant 0 : index
    %74 = memref.load %arg10[%c0_35, %c0_36] : memref<1x1xf32, #tpu.memory_space<smem>>
    %75 = vector.broadcast %74 : f32 to vector<64x1xf32>
    %76 = arith.addf %73, %75 : vector<64x1xf32>
    %c0_37 = arith.constant 0 : index
    %c0_38 = arith.constant 0 : index
    %77 = vector.load %arg11[%c0_37, %c0_38] : memref<64x1xf32, #tpu.memory_space<vmem>>, vector<64x1xf32>
    tpu.vector_store %arg11[%c0_37, %c0_38], %76 {strides = array<i32>} : memref<64x1xf32, #tpu.memory_space<vmem>>, vector<64x1xf32>,
    return
  }
}

</mosaic_0001>

<llo_original>
// kernel: tpu_custom_call.1
$region0: #{tpu_custom_call.1}
  #allocation0 [shape = 'u32[]', space=smem, size = 0x4, offset = 0x4, fixed_abs, tag = 'smem constant byte address 0x4 - core index']
  #allocation1 [shape = 'u32[72,128]{1,0:T(1,128)}', space=vmem, size = 0x9000, scoped, tag = 'internal scratch']
  #allocation2 [shape = 'f32[1,1]{1,0:T(1,128)S(6)}', space=smem, size = 0x200, scoped, tag = 'scoped memory for tpu_custom_call.1']
  %s0 = inlined_call_operand.vmem [shape: f32[64,20], index: 0, kind: input, shape index: {}]
  %s1 = inlined_call_operand.vmem [shape: bf16[20,64], index: 1, kind: input, shape index: {}]
  %s2 = inlined_call_operand.vmem [shape: f32[1,64], index: 2, kind: input, shape index: {}]
  %s3 = inlined_call_operand.vmem [shape: f32[1,64], index: 3, kind: input, shape index: {}]
  %s4 = inlined_call_operand.vmem [shape: f32[1,64], index: 4, kind: input, shape index: {}]
  %s5 = inlined_call_operand.vmem [shape: bf16[64,64], index: 5, kind: input, shape index: {}]
  %s6 = inlined_call_operand.vmem [shape: f32[1,64], index: 6, kind: input, shape index: {}]
  %s7 = inlined_call_operand.vmem [shape: f32[1,64], index: 7, kind: input, shape index: {}]
  %s8 = inlined_call_operand.vmem [shape: f32[1,64], index: 8, kind: input, shape index: {}]
  %s9 = inlined_call_operand.vmem [shape: f32[1,64], index: 9, kind: input, shape index: {}]
  %s10 = inlined_call_operand.<no memory space> [shape: f32[1,1], index: 10, kind: input, shape index: {}]
  %s11 = inlined_call_operand.vmem [shape: f32[64,1], index: 11, kind: output, shape index: {}]
  %s12 = sld [smem:[#allocation0]]
  $region54: #{tpu_custom_call.1} parent=0
    _
  %s14 = ssub.s32 1, %s12
  %s15 = scalar_select 0, %s14, %s12
  %16 = sst [smem:[#allocation2]] %s10
  // Predicated region
  $region2: #{tpu_custom_call.1} parent=0 // pred_check
    _
  $region3: #{tpu_custom_call.1} parent=0 // pred_check_branch
    %18 = sbr.rel (0) target = $region5
  $region4: #{tpu_custom_call.1} parent=0 // pred_region
    _
  $region5: #{tpu_custom_call.1} parent=0 // pred_fallthru
    _
  // Predicated region
  $region6: #{tpu_custom_call.1} parent=0 // pred_check
    _
  $region7: #{tpu_custom_call.1} parent=0 // pred_check_branch
    %20 = sbr.rel (0) target = $region9
  $region8: #{tpu_custom_call.1} parent=0 // pred_region
    _
  $region9: #{tpu_custom_call.1} parent=0 // pred_fallthru
    _
  // Predicated region
  $region10: #{tpu_custom_call.1} parent=0 // pred_check
    _
  $region11: #{tpu_custom_call.1} parent=0 // pred_check_branch
    %22 = sbr.rel (0) target = $region13
  $region12: #{tpu_custom_call.1} parent=0 // pred_region
    _
  $region13: #{tpu_custom_call.1} parent=0 // pred_fallthru
    _
  // Predicated region
  $region14: #{tpu_custom_call.1} parent=0 // pred_check
    _
  $region15: #{tpu_custom_call.1} parent=0 // pred_check_branch
    %24 = sbr.rel (0) target = $region17
  $region16: #{tpu_custom_call.1} parent=0 // pred_region
    _
  $region17: #{tpu_custom_call.1} parent=0 // pred_fallthru
    _
  // Predicated region
  $region18: #{tpu_custom_call.1} parent=0 // pred_check
    _
  $region19: #{tpu_custom_call.1} parent=0 // pred_check_branch
    %26 = sbr.rel (0) target = $region21
  $region20: #{tpu_custom_call.1} parent=0 // pred_region
    _
  $region21: #{tpu_custom_call.1} parent=0 // pred_fallthru
    _
  // Predicated region
  $region22: #{tpu_custom_call.1} parent=0 // pred_check
    _
  $region23: #{tpu_custom_call.1} parent=0 // pred_check_branch
    %28 = sbr.rel (0) target = $region25
  $region24: #{tpu_custom_call.1} parent=0 // pred_region
    _
  $region25: #{tpu_custom_call.1} parent=0 // pred_fallthru
    _
  // Predicated region
  $region26: #{tpu_custom_call.1} parent=0 // pred_check
    _
  $region27: #{tpu_custom_call.1} parent=0 // pred_check_branch
    %30 = sbr.rel (0) target = $region29
  $region28: #{tpu_custom_call.1} parent=0 // pred_region
    _
  $region29: #{tpu_custom_call.1} parent=0 // pred_fallthru
    _
  // Predicated region
  $region30: #{tpu_custom_call.1} parent=0 // pred_check
    _
  $region31: #{tpu_custom_call.1} parent=0 // pred_check_branch
    %32 = sbr.rel (0) target = $region33
  $region32: #{tpu_custom_call.1} parent=0 // pred_region
    _
  $region33: #{tpu_custom_call.1} parent=0 // pred_fallthru
    _
  // Predicated region
  $region34: #{tpu_custom_call.1} parent=0 // pred_check
    _
  $region35: #{tpu_custom_call.1} parent=0 // pred_check_branch
    %34 = sbr.rel (0) target = $region37
  $region36: #{tpu_custom_call.1} parent=0 // pred_region
    _
  $region37: #{tpu_custom_call.1} parent=0 // pred_fallthru
    _
  // Predicated region
  $region38: #{tpu_custom_call.1} parent=0 // pred_check
    _
  $region39: #{tpu_custom_call.1} parent=0 // pred_check_branch
    %36 = sbr.rel (0) target = $region41
  $region40: #{tpu_custom_call.1} parent=0 // pred_region
    _
  $region41: #{tpu_custom_call.1} parent=0 // pred_fallthru
    _
  // Predicated region
  $region42: #{tpu_custom_call.1} parent=0 // pred_check
    _
  $region43: #{tpu_custom_call.1} parent=0 // pred_check_branch
    %38 = sbr.rel (0) target = $region45
  $region44: #{tpu_custom_call.1} parent=0 // pred_region
    _
  $region45: #{tpu_custom_call.1} parent=0 // pred_fallthru
    _
  %v40 = vld [vmem:[%s0] sm:$0xff]
  %v41 = vld [vmem:[%s0 + $0x8] sm:$0xff]
  %v42 = vld [vmem:[%s0 + $0x10] sm:$0xff]
  %v43 = vld [vmem:[%s0 + $0x18] sm:$0xff]
  %v44 = vld [vmem:[%s0 + $0x20] sm:$0xff]
  %v45 = vld [vmem:[%s0 + $0x28] sm:$0xff]
  %v46 = vld [vmem:[%s0 + $0x30] sm:$0xff]
  %v47 = vld [vmem:[%s0 + $0x38] sm:$0xff]
  %v48 = vpack.c.bf16 %v41, %v40
  %v49 = vpack.c.bf16 %v43, %v42
  %v50 = vpack.c.bf16 %v45, %v44
  %v51 = vpack.c.bf16 %v47, %v46
  %v52 = vld [vmem:[%s1] sm:$0xf]
  %v53 = vld [vmem:[%s1 + $0x4] sm:$0xf]
  %v54 = vld [vmem:[%s1 + $0x8] sm:$0x3]
  %v55 = vld [vmem:[%s2] sm:$0x1]
  %v57 = vperm.slane %v55, 0
  %v62 = vunpack.c.l.b16 %v52
  %v63 = vunpack.c.l.b16 %v53
  %v64 = vunpack.c.l.b16 %v54
  %v65 = vpack.c.b16 %v63, %v62
  %v66 = vpack.c.b16 %v64, %v64
  %vm68 = vcmask 162816
  %v70 = vsel %vm68, %v48, 0
  %v73 = vsel %vm68, %v49, 0
  %v76 = vsel %vm68, %v50, 0
  %v79 = vsel %vm68, %v51, 0
  %vm81 = vcmask 1041408
  %v83 = vsel %vm81, %v66, 0
  %85 = vmatpush.bf16.msra.mxu0 0
  %86 = vmatpush.bf16.msra.mxu0 0
  %87 = vmatpush.bf16.msra.mxu0 0
  %88 = vmatpush.bf16.msra.mxu0 0
  %89 = vmatpush.bf16.msra.mxu0 0
  %90 = vmatpush.bf16.msra.mxu0 0
  %91 = vmatpush.bf16.msra.mxu0 %v83
  %92 = vmatpush.bf16.msra.mxu0 %v65
  %93 = vmatmul.bf16.gmra.mxu0 %v70
  %v94 = vpop.f32.mrf.mxu0
  %v95 = vadd.f32 %v57, %v94
  %v96 = vpop.f32.mrf.mxu0
  %v97 = vadd.f32 %v57, %v96
  %98 = vmatmul.bf16.gmra.mxu0 %v73
  %v99 = vpop.f32.mrf.mxu0
  %v100 = vadd.f32 %v57, %v99
  %v101 = vpop.f32.mrf.mxu0
  %v102 = vadd.f32 %v57, %v101
  %103 = vmatmul.bf16.gmra.mxu0 %v76
  %v104 = vpop.f32.mrf.mxu0
  %v105 = vadd.f32 %v57, %v104
  %v106 = vpop.f32.mrf.mxu0
  %v107 = vadd.f32 %v57, %v106
  %108 = vmatmul.bf16.gmra.mxu0 %v79
  %v109 = vpop.f32.mrf.mxu0
  %v110 = vadd.f32 %v57, %v109
  %v111 = vpop.f32.mrf.mxu0
  %v112 = vadd.f32 %v57, %v111
  %113 = vdwg.mxu0
  %v114 = vmax.f32 %v95, 0.0
  %v115 = vmax.f32 %v97, 0.0
  %v116 = vmax.f32 %v100, 0.0
  %v117 = vmax.f32 %v102, 0.0
  %v118 = vmax.f32 %v105, 0.0
  %v119 = vmax.f32 %v107, 0.0
  %v120 = vmax.f32 %v110, 0.0
  %v121 = vmax.f32 %v112, 0.0
  %v122 = vld [vmem:[%s3] sm:$0x1]
  %v123 = vld [vmem:[%s4] sm:$0x1]
  %vm124 = vcmask 523264
  %v125 = vsel %vm124, %v114, 0.0
  %v126 = vsel %vm124, %v115, 0.0
  %v127 = vadd.f32 %v125, %v126
  %v128 = vsel %vm124, %v116, 0.0
  %v129 = vadd.f32 %v127, %v128
  %v130 = vsel %vm124, %v117, 0.0
  %v131 = vadd.f32 %v129, %v130
  %v132 = vsel %vm124, %v118, 0.0
  %v133 = vadd.f32 %v131, %v132
  %v134 = vsel %vm124, %v119, 0.0
  %v135 = vadd.f32 %v133, %v134
  %v136 = vsel %vm124, %v120, 0.0
  %v137 = vadd.f32 %v135, %v136
  %v138 = vsel %vm124, %v121, 0.0
  %v139 = vadd.f32 %v137, %v138
  %v140 = vrot.slane %v139, 4
  %v141 = vadd.f32 %v139, %v140
  %v142 = vrot.slane %v141, 2
  %v143 = vadd.f32 %v141, %v142
  %v144 = vrot.slane %v143, 1
  %v145 = vadd.f32 %v143, %v144
  %v146 = vmul.f32 %v145, 0.015625
  %v147 = vmul.f32 %v114, %v114
  %v148 = vmul.f32 %v115, %v115
  %v149 = vmul.f32 %v116, %v116
  %v150 = vmul.f32 %v117, %v117
  %v151 = vmul.f32 %v118, %v118
  %v152 = vmul.f32 %v119, %v119
  %v153 = vmul.f32 %v120, %v120
  %v154 = vmul.f32 %v121, %v121
  %v155 = vsel %vm124, %v147, 0.0
  %v156 = vsel %vm124, %v148, 0.0
  %v157 = vadd.f32 %v155, %v156
  %v158 = vsel %vm124, %v149, 0.0
  %v159 = vadd.f32 %v157, %v158
  %v160 = vsel %vm124, %v150, 0.0
  %v161 = vadd.f32 %v159, %v160
  %v162 = vsel %vm124, %v151, 0.0
  %v163 = vadd.f32 %v161, %v162
  %v164 = vsel %vm124, %v152, 0.0
  %v165 = vadd.f32 %v163, %v164
  %v166 = vsel %vm124, %v153, 0.0
  %v167 = vadd.f32 %v165, %v166
  %v168 = vsel %vm124, %v154, 0.0
  %v169 = vadd.f32 %v167, %v168
  %v170 = vrot.slane %v169, 4
  %v171 = vadd.f32 %v169, %v170
  %v172 = vrot.slane %v171, 2
  %v173 = vadd.f32 %v171, %v172
  %v174 = vrot.slane %v173, 1
  %v175 = vadd.f32 %v173, %v174
  %v176 = vmul.f32 %v175, 0.015625
  %v177 = vmul.f32 %v146, %v146
  %v178 = vsub.f32 %v176, %v177
  %v179 = vmax.f32 %v178, 0.0
  %v180 = vsub.f32 %v114, %v146
  %v181 = vsub.f32 %v115, %v146
  %v182 = vsub.f32 %v116, %v146
  %v183 = vsub.f32 %v117, %v146
  %v184 = vsub.f32 %v118, %v146
  %v185 = vsub.f32 %v119, %v146
  %v186 = vsub.f32 %v120, %v146
  %v187 = vsub.f32 %v121, %v146
  %v188 = vadd.f32 %v179, 1e-05
  %v189 = vrsqrt.pop %v188
  %v190 = vmul.f32 %v189, %v188
  %v191 = vmul.f32 %v190, %v189
  %v192 = vmul.f32 0.5, %v191
  %v193 = vsub.f32 1.5, %v192
  %v194 = vmul.f32 %v189, %v193
  %vm195 = vweird.f32 %v188
  %vm196 = vweird.f32 %v189
  %vm197 = vmor %vm195, %vm196
  %v198 = vsel %vm197, %v189, %v194
  %v199 = vmul.f32 %v180, %v198
  %v200 = vmul.f32 %v181, %v198
  %v201 = vmul.f32 %v182, %v198
  %v202 = vmul.f32 %v183, %v198
  %v203 = vmul.f32 %v184, %v198
  %v204 = vmul.f32 %v185, %v198
  %v205 = vmul.f32 %v186, %v198
  %v206 = vmul.f32 %v187, %v198
  %v208 = vperm.slane %v122, 0
  %v210 = vmul.f32 %v199, %v208
  %v211 = vmul.f32 %v200, %v208
  %v212 = vmul.f32 %v201, %v208
  %v213 = vmul.f32 %v202, %v208
  %v214 = vmul.f32 %v203, %v208
  %v215 = vmul.f32 %v204, %v208
  %v216 = vmul.f32 %v205, %v208
  %v217 = vmul.f32 %v206, %v208
  %v219 = vperm.slane %v123, 0
  %v221 = vadd.f32 %v210, %v219
  %v222 = vadd.f32 %v211, %v219
  %v223 = vadd.f32 %v212, %v219
  %v224 = vadd.f32 %v213, %v219
  %v225 = vadd.f32 %v214, %v219
  %v226 = vadd.f32 %v215, %v219
  %v227 = vadd.f32 %v216, %v219
  %v228 = vadd.f32 %v217, %v219
  %v229 = vpack.c.bf16 %v222, %v221
  %v230 = vpack.c.bf16 %v224, %v223
  %v231 = vpack.c.bf16 %v226, %v225
  %v232 = vpack.c.bf16 %v228, %v227
  %v233 = vld [vmem:[%s5] sm:$0xf]
  %v234 = vld [vmem:[%s5 + $0x4] sm:$0xf]
  %v235 = vld [vmem:[%s5 + $0x8] sm:$0xf]
  %v236 = vld [vmem:[%s5 + $0xc] sm:$0xf]
  %v237 = vld [vmem:[%s5 + $0x10] sm:$0xf]
  %v238 = vld [vmem:[%s5 + $0x14] sm:$0xf]
  %v239 = vld [vmem:[%s5 + $0x18] sm:$0xf]
  %v240 = vld [vmem:[%s5 + $0x1c] sm:$0xf]
  %v241 = vld [vmem:[%s6] sm:$0x1]
  %v243 = vperm.slane %v241, 0
  %v253 = vunpack.c.l.b16 %v233
  %v254 = vunpack.c.l.b16 %v234
  %v255 = vunpack.c.l.b16 %v235
  %v256 = vunpack.c.l.b16 %v236
  %v257 = vunpack.c.l.b16 %v237
  %v258 = vunpack.c.l.b16 %v238
  %v259 = vunpack.c.l.b16 %v239
  %v260 = vunpack.c.l.b16 %v240
  %v261 = vpack.c.b16 %v254, %v253
  %v262 = vpack.c.b16 %v256, %v255
  %v263 = vpack.c.b16 %v258, %v257
  %v264 = vpack.c.b16 %v260, %v259
  %v270 = vsel %vm124, %v229, 0
  %v273 = vsel %vm124, %v230, 0
  %v276 = vsel %vm124, %v231, 0
  %v279 = vsel %vm124, %v232, 0
  %281 = vmatpush.bf16.msra.mxu0 0
  %282 = vmatpush.bf16.msra.mxu0 0
  %283 = vmatpush.bf16.msra.mxu0 0
  %284 = vmatpush.bf16.msra.mxu0 0
  %285 = vmatpush.bf16.msra.mxu0 %v264
  %286 = vmatpush.bf16.msra.mxu0 %v263
  %287 = vmatpush.bf16.msra.mxu0 %v262
  %288 = vmatpush.bf16.msra.mxu0 %v261
  %289 = vmatmul.bf16.gmra.mxu0 %v270
  %v290 = vpop.f32.mrf.mxu0
  %v291 = vadd.f32 %v243, %v290
  %v292 = vpop.f32.mrf.mxu0
  %v293 = vadd.f32 %v243, %v292
  %294 = vmatmul.bf16.gmra.mxu0 %v273
  %v295 = vpop.f32.mrf.mxu0
  %v296 = vadd.f32 %v243, %v295
  %v297 = vpop.f32.mrf.mxu0
  %v298 = vadd.f32 %v243, %v297
  %299 = vmatmul.bf16.gmra.mxu0 %v276
  %v300 = vpop.f32.mrf.mxu0
  %v301 = vadd.f32 %v243, %v300
  %v302 = vpop.f32.mrf.mxu0
  %v303 = vadd.f32 %v243, %v302
  %304 = vmatmul.bf16.gmra.mxu0 %v279
  %v305 = vpop.f32.mrf.mxu0
  %v306 = vadd.f32 %v243, %v305
  %v307 = vpop.f32.mrf.mxu0
  %v308 = vadd.f32 %v243, %v307
  %309 = vdwg.mxu0
  %v310 = vmax.f32 %v291, 0.0
  %v311 = vmax.f32 %v293, 0.0
  %v312 = vmax.f32 %v296, 0.0
  %v313 = vmax.f32 %v298, 0.0
  %v314 = vmax.f32 %v301, 0.0
  %v315 = vmax.f32 %v303, 0.0
  %v316 = vmax.f32 %v306, 0.0
  %v317 = vmax.f32 %v308, 0.0
  %v318 = vld [vmem:[%s7] sm:$0x1]
  %v319 = vld [vmem:[%s8] sm:$0x1]
  %v320 = vsel %vm124, %v310, 0.0
  %v321 = vsel %vm124, %v311, 0.0
  %v322 = vadd.f32 %v320, %v321
  %v323 = vsel %vm124, %v312, 0.0
  %v324 = vadd.f32 %v322, %v323
  %v325 = vsel %vm124, %v313, 0.0
  %v326 = vadd.f32 %v324, %v325
  %v327 = vsel %vm124, %v314, 0.0
  %v328 = vadd.f32 %v326, %v327
  %v329 = vsel %vm124, %v315, 0.0
  %v330 = vadd.f32 %v328, %v329
  %v331 = vsel %vm124, %v316, 0.0
  %v332 = vadd.f32 %v330, %v331
  %v333 = vsel %vm124, %v317, 0.0
  %v334 = vadd.f32 %v332, %v333
  %v335 = vrot.slane %v334, 4
  %v336 = vadd.f32 %v334, %v335
  %v337 = vrot.slane %v336, 2
  %v338 = vadd.f32 %v336, %v337
  %v339 = vrot.slane %v338, 1
  %v340 = vadd.f32 %v338, %v339
  %v341 = vmul.f32 %v340, 0.015625
  %v342 = vmul.f32 %v310, %v310
  %v343 = vmul.f32 %v311, %v311
  %v344 = vmul.f32 %v312, %v312
  %v345 = vmul.f32 %v313, %v313
  %v346 = vmul.f32 %v314, %v314
  %v347 = vmul.f32 %v315, %v315
  %v348 = vmul.f32 %v316, %v316
  %v349 = vmul.f32 %v317, %v317
  %v350 = vsel %vm124, %v342, 0.0
  %v351 = vsel %vm124, %v343, 0.0
  %v352 = vadd.f32 %v350, %v351
  %v353 = vsel %vm124, %v344, 0.0
  %v354 = vadd.f32 %v352, %v353
  %v355 = vsel %vm124, %v345, 0.0
  %v356 = vadd.f32 %v354, %v355
  %v357 = vsel %vm124, %v346, 0.0
  %v358 = vadd.f32 %v356, %v357
  %v359 = vsel %vm124, %v347, 0.0
  %v360 = vadd.f32 %v358, %v359
  %v361 = vsel %vm124, %v348, 0.0
  %v362 = vadd.f32 %v360, %v361
  %v363 = vsel %vm124, %v349, 0.0
  %v364 = vadd.f32 %v362, %v363
  %v365 = vrot.slane %v364, 4
  %v366 = vadd.f32 %v364, %v365
  %v367 = vrot.slane %v366, 2
  %v368 = vadd.f32 %v366, %v367
  %v369 = vrot.slane %v368, 1
  %v370 = vadd.f32 %v368, %v369
  %v371 = vmul.f32 %v370, 0.015625
  %v372 = vmul.f32 %v341, %v341
  %v373 = vsub.f32 %v371, %v372
  %v374 = vmax.f32 %v373, 0.0
  %v375 = vsub.f32 %v310, %v341
  %v376 = vsub.f32 %v311, %v341
  %v377 = vsub.f32 %v312, %v341
  %v378 = vsub.f32 %v313, %v341
  %v379 = vsub.f32 %v314, %v341
  %v380 = vsub.f32 %v315, %v341
  %v381 = vsub.f32 %v316, %v341
  %v382 = vsub.f32 %v317, %v341
  %v383 = vadd.f32 %v374, 1e-05
  %v384 = vrsqrt.pop %v383
  %v385 = vmul.f32 %v384, %v383
  %v386 = vmul.f32 %v385, %v384
  %v387 = vmul.f32 0.5, %v386
  %v388 = vsub.f32 1.5, %v387
  %v389 = vmul.f32 %v384, %v388
  %vm390 = vweird.f32 %v383
  %vm391 = vweird.f32 %v384
  %vm392 = vmor %vm390, %vm391
  %v393 = vsel %vm392, %v384, %v389
  %v394 = vmul.f32 %v375, %v393
  %v395 = vmul.f32 %v376, %v393
  %v396 = vmul.f32 %v377, %v393
  %v397 = vmul.f32 %v378, %v393
  %v398 = vmul.f32 %v379, %v393
  %v399 = vmul.f32 %v380, %v393
  %v400 = vmul.f32 %v381, %v393
  %v401 = vmul.f32 %v382, %v393
  %v403 = vperm.slane %v318, 0
  %v405 = vmul.f32 %v394, %v403
  %v406 = vmul.f32 %v395, %v403
  %v407 = vmul.f32 %v396, %v403
  %v408 = vmul.f32 %v397, %v403
  %v409 = vmul.f32 %v398, %v403
  %v410 = vmul.f32 %v399, %v403
  %v411 = vmul.f32 %v400, %v403
  %v412 = vmul.f32 %v401, %v403
  %v414 = vperm.slane %v319, 0
  %v416 = vadd.f32 %v405, %v414
  %v417 = vadd.f32 %v406, %v414
  %v418 = vadd.f32 %v407, %v414
  %v419 = vadd.f32 %v408, %v414
  %v420 = vadd.f32 %v409, %v414
  %v421 = vadd.f32 %v410, %v414
  %v422 = vadd.f32 %v411, %v414
  %v423 = vadd.f32 %v412, %v414
  %v424 = vld [vmem:[%s9] sm:$0x1]
  %v426 = vperm.slane %v424, 0
  %v428 = vmul.f32 %v416, %v426
  %v429 = vmul.f32 %v417, %v426
  %v430 = vmul.f32 %v418, %v426
  %v431 = vmul.f32 %v419, %v426
  %v432 = vmul.f32 %v420, %v426
  %v433 = vmul.f32 %v421, %v426
  %v434 = vmul.f32 %v422, %v426
  %v435 = vmul.f32 %v423, %v426
  %v436 = vsel %vm124, %v428, 0.0
  %437 = vadd.xlane.f32.xlu0 %v436
  %v438 = vpop.xlane.xlu0 %437
  %v439 = vsel %vm124, %v429, 0.0
  %440 = vadd.xlane.f32.xlu0 %v439
  %v441 = vpop.xlane.xlu0 %440
  %v442 = vsel %vm124, %v430, 0.0
  %443 = vadd.xlane.f32.xlu0 %v442
  %v444 = vpop.xlane.xlu0 %443
  %v445 = vsel %vm124, %v431, 0.0
  %446 = vadd.xlane.f32.xlu0 %v445
  %v447 = vpop.xlane.xlu0 %446
  %v448 = vsel %vm124, %v432, 0.0
  %449 = vadd.xlane.f32.xlu0 %v448
  %v450 = vpop.xlane.xlu0 %449
  %v451 = vsel %vm124, %v433, 0.0
  %452 = vadd.xlane.f32.xlu0 %v451
  %v453 = vpop.xlane.xlu0 %452
  %v454 = vsel %vm124, %v434, 0.0
  %455 = vadd.xlane.f32.xlu0 %v454
  %v456 = vpop.xlane.xlu0 %455
  %v457 = vsel %vm124, %v435, 0.0
  %458 = vadd.xlane.f32.xlu0 %v457
  %v459 = vpop.xlane.xlu0 %458
  %s460 = sld [smem:[#allocation2]]
  %v461 = vstv %s460
  %v462 = vadd.f32 %v438, %v461
  %v463 = vadd.f32 %v441, %v461
  %v464 = vadd.f32 %v444, %v461
  %v465 = vadd.f32 %v447, %v461
  %v466 = vadd.f32 %v450, %v461
  %v467 = vadd.f32 %v453, %v461
  %v468 = vadd.f32 %v456, %v461
  %v469 = vadd.f32 %v459, %v461
  %vm470 = vcmask 7168
  %471 = vst.msk [vmem:[%s11] sm:$0xff] %vm470, %v462
  %472 = vst.msk [vmem:[%s11 + $0x8] sm:$0xff] %vm470, %v463
  %473 = vst.msk [vmem:[%s11 + $0x10] sm:$0xff] %vm470, %v464
  %474 = vst.msk [vmem:[%s11 + $0x18] sm:$0xff] %vm470, %v465
  %475 = vst.msk [vmem:[%s11 + $0x20] sm:$0xff] %vm470, %v466
  %476 = vst.msk [vmem:[%s11 + $0x28] sm:$0xff] %vm470, %v467
  %477 = vst.msk [vmem:[%s11 + $0x30] sm:$0xff] %vm470, %v468
  %478 = vst.msk [vmem:[%s11 + $0x38] sm:$0xff] %vm470, %v469
  // Predicated region
  $region46: #{tpu_custom_call.1} parent=0 // pred_check
    _
  $region47: #{tpu_custom_call.1} parent=0 // pred_check_branch
    %480 = sbr.rel (0) target = $region49
  $region48: #{tpu_custom_call.1} parent=0 // pred_region
    _
  $region49: #{tpu_custom_call.1} parent=0 // pred_fallthru
    _
  // Predicated region
  $region50: #{tpu_custom_call.1} parent=0 // pred_check
    _
  $region51: #{tpu_custom_call.1} parent=0 // pred_check_branch
    %482 = sbr.rel (0) target = $region53
  $region52: #{tpu_custom_call.1} parent=0 // pred_region
    _
  $region53: #{tpu_custom_call.1} parent=0 // pred_fallthru
    _

</llo_original>
